<compile_context>
chip_gen: v6e
topology: v6e:2x2x1
jax: 0.10.0
libtpu: 0.0.40
codegen_flags: <defaults>
</compile_context>

<pallas_src>
import functools

import jax
import jax.numpy as jnp
from jax.experimental import pallas as pl
from jax.experimental.pallas import tpu as pltpu

_MIB = 1 << 20
_VMEM_BUDGET = 40 * _MIB   # conservative: fits v7x's 64 MiB VMEM with headroom


def _round_up(x, m):
    return (x + m - 1) // m * m


def _sublane(dtype):
    itemsize = jnp.dtype(dtype).itemsize
    return {1: 32, 2: 16}.get(itemsize, 8)


def _resident_spec(shape, index_map):
    """Single-buffered BlockSpec for blocks whose index never changes."""
    try:
        return pl.BlockSpec(shape, index_map, pipeline_mode=pl.Buffered(1))
    except Exception:  # pipeline_mode / Buffered unavailable -> default buffering
        return pl.BlockSpec(shape, index_map)


# ----------------------------------------------------------------------------
# Kernels
# ----------------------------------------------------------------------------
def _head_kernel_concat(base_ref, know_ref, w1_ref, b1_ref, w2_ref, b2_ref,
                        out_ref, acc_ref, *, h_base):
    """out = tanh(concat([base, know], 1) @ W1 + b1) @ W2 + b2.

    The concat is folded into the first matmul by statically slicing W1
    row-wise (h_base is padded to the sublane tile so the slice is free).
    The second GEMM is accumulated over the H1 grid axis in f32 scratch.
    """
    j = pl.program_id(1)

    @pl.when(j == 0)
    def _():
        acc_ref[...] = jnp.zeros_like(acc_ref)

    h = jnp.dot(base_ref[...], w1_ref[:h_base, :],
                preferred_element_type=jnp.float32)
    h = h + jnp.dot(know_ref[...], w1_ref[h_base:, :],
                    preferred_element_type=jnp.float32)
    h = jnp.tanh(h + b1_ref[...])
    acc_ref[...] += jnp.dot(h.astype(w2_ref.dtype), w2_ref[...],
                            preferred_element_type=jnp.float32)

    @pl.when(j == pl.num_programs(1) - 1)
    def _():
        out_ref[...] = (acc_ref[...] + b2_ref[...]).astype(out_ref.dtype)


def _head_kernel_weighted(wts_ref, base_ref, know_ref, w1_ref, b1_ref,
                          w2_ref, b2_ref, out_ref, acc_ref):
    """combined = w0*base + w1*know   ('average' / 'attention' / 'gated');
    out = tanh(combined @ W1 + b1) @ W2 + b2.  w0, w1 are SMEM scalars.
    The combine is done directly in the compute dtype (no f32 round trip)."""
    j = pl.program_id(1)

    @pl.when(j == 0)
    def _():
        acc_ref[...] = jnp.zeros_like(acc_ref)

    dt = base_ref.dtype
    combined = (wts_ref[0].astype(dt) * base_ref[...]
                + wts_ref[1].astype(dt) * know_ref[...])
    h = jnp.tanh(jnp.dot(combined, w1_ref[...],
                         preferred_element_type=jnp.float32) + b1_ref[...])
    acc_ref[...] += jnp.dot(h.astype(w2_ref.dtype), w2_ref[...],
                            preferred_element_type=jnp.float32)

    @pl.when(j == pl.num_programs(1) - 1)
    def _():
        out_ref[...] = (acc_ref[...] + b2_ref[...]).astype(out_ref.dtype)


# ----------------------------------------------------------------------------
# Wrapper (parameter prep, scalar gate/attention math, pallas_call)
# ----------------------------------------------------------------------------
def combined_model_forward(base_output, knowledge_last_hidden_state, params,
                           combination_method="concat",
                           compute_dtype=jnp.float32,
                           batch_tile=512,
                           h1_tile=None):
    """Mirrors CombinedModel.forward (post-backbone) for a combination_method."""
    # CLS pooling: knowledge_output.last_hidden_state[:, 0, :]  (wrapper glue).
    know = knowledge_last_hidden_state[:, 0, :]

    B, Hb = base_output.shape
    Hk = know.shape[-1]

    W1 = params["W1"]                                  # (combined_size, H1)
    b1 = params["b1"].reshape(1, -1).astype(jnp.float32)
    W2 = params["W2"]                                  # (H1, n_classes)
    b2 = params["b2"].reshape(1, -1).astype(jnp.float32)
    H1 = W1.shape[1]
    n_classes = W2.shape[1]

    cdt = jnp.dtype(compute_dtype)
    a_bytes = cdt.itemsize
    sub = _sublane(cdt)                 # sublane tile: f32->8, bf16->16, int8->32
    out_dtype = compute_dtype if a_bytes < 4 else jnp.float32
    o_bytes = jnp.dtype(out_dtype).itemsize
    concat = combination_method == "concat"

    # ---- class (lane) padding -> unmasked lane-dense stores ----------------
    n_pad = _round_up(max(n_classes, 1), 128)
    if n_pad != n_classes:
        W2 = jnp.pad(W2, ((0, 0), (0, n_pad - n_classes)))
        b2 = jnp.pad(b2, ((0, 0), (0, n_pad - n_classes)))

    # ---- feature (sublane) alignment so the W1 row-split is tile-aligned ---
    Hb_pad = _round_up(Hb, sub)
    Hk_pad = _round_up(Hk, sub)
    if concat:
        assert W1.shape[0] == Hb + Hk
        if (Hb_pad, Hk_pad) != (Hb, Hk):
            W1n = jnp.zeros((Hb_pad + Hk_pad, H1), W1.dtype)
            W1n = W1n.at[:Hb, :].set(W1[:Hb])
            W1n = W1n.at[Hb_pad:Hb_pad + Hk, :].set(W1[Hb:])
            W1 = W1n
        K = Hb_pad + Hk_pad
    else:
        assert Hb == Hk and W1.shape[0] == Hb
        if Hb_pad != Hb:
            W1 = jnp.pad(W1, ((0, Hb_pad - Hb), (0, 0)))
        K = Hb_pad

    # ---- H1 tiling: stream W1/W2 when they would not fit the VMEM budget ---
    def _wbytes(th1, nbuf):
        return nbuf * ((K * th1 + th1 * n_pad) * a_bytes + th1 * 4) + n_pad * 4

    if h1_tile is not None and h1_tile < H1:
        TH1 = h1_tile
    elif H1 > 128 and _wbytes(H1, 1) > _VMEM_BUDGET // 2:
        TH1 = 128
        for cand in (1024, 512, 256):
            if cand < H1 and _wbytes(cand, 2) <= _VMEM_BUDGET // 2:
                TH1 = cand
                break
    else:
        TH1 = H1
    if TH1 < H1:
        assert TH1 % 128 == 0, "h1_tile must be a multiple of 128"
        H1_pad = _round_up(H1, TH1)
    else:
        TH1 = H1
        H1_pad = H1
    n_h1 = H1_pad // TH1
    if H1_pad != H1:
        W1 = jnp.pad(W1, ((0, 0), (0, H1_pad - H1)))
        b1 = jnp.pad(b1, ((0, 0), (0, H1_pad - H1)))
        W2 = jnp.pad(W2, ((0, H1_pad - H1), (0, 0)))

    # ---- batch tiling (TB always a multiple of the sublane tile) -----------
    B_sub = _round_up(B, sub)
    if B_sub <= batch_tile:
        # Aim for >=2 batch steps when possible so the "parallel" batch axis
        # can shard across both v7x TensorCores.
        TB = max(sub, _round_up(pl.cdiv(B_sub, 2), sub))
    else:
        TB = max(sub, _round_up(min(batch_tile, B_sub), sub))

    n_wbuf = 1 if n_h1 == 1 else 2

    def _footprint(tb):
        return (_wbytes(TH1, n_wbuf)
                + 2 * tb * (Hb_pad + Hk_pad) * a_bytes   # double-buffered acts
                + 2 * tb * n_pad * o_bytes                # double-buffered out
                + tb * n_pad * 4)                         # f32 accumulator

    while TB > sub and _footprint(TB) > _VMEM_BUDGET:
        TB = max(sub, _round_up(TB // 2, sub))

    B_pad = _round_up(B, TB)
    grid = (B_pad // TB, n_h1)

    # TODO(synk): if the streamed weight blocks still exceed v7x's 64 MiB VMEM
    #             at TH1=128 the class (n_pad) dim would need tiling as well;
    #             not required at the sizes exercised here.
    vmem_limit = int(min(100 * _MIB, max(_footprint(TB) + 8 * _MIB, 32 * _MIB)))

    # ---- cast + pad activations ---------------------------------------------
    base = base_output.astype(compute_dtype)
    know = know.astype(compute_dtype)
    W1 = W1.astype(compute_dtype)
    W2 = W2.astype(compute_dtype)
    if Hb_pad != Hb:
        base = jnp.pad(base, ((0, 0), (0, Hb_pad - Hb)))
    if Hk_pad != Hk:
        know = jnp.pad(know, ((0, 0), (0, Hk_pad - Hk)))
    if B_pad != B:
        base = jnp.pad(base, ((0, B_pad - B), (0, 0)))
        know = jnp.pad(know, ((0, B_pad - B), (0, 0)))

    # ---- specs ---------------------------------------------------------------
    def act_spec(h):
        return pl.BlockSpec((TB, h), lambda i, j: (i, 0))

    def build_in_specs(single_buffer_weights):
        def wspec(shape, imap, always_resident=False):
            if single_buffer_weights and (n_h1 == 1 or always_resident):
                return _resident_spec(shape, imap)
            return pl.BlockSpec(shape, imap)
        specs = [act_spec(Hb_pad), act_spec(Hk_pad),
                 wspec((K, TH1), lambda i, j: (0, j)),
                 wspec((1, TH1), lambda i, j: (0, j)),
                 wspec((TH1, n_pad), lambda i, j: (j, 0)),
                 wspec((1, n_pad), lambda i, j: (0, 0), always_resident=True)]
        if not concat:
            specs = [pl.BlockSpec(memory_space=pltpu.MemorySpace.SMEM)] + specs
        return specs

    out_spec = pl.BlockSpec((TB, n_pad), lambda i, j: (i, 0))
    out_shape = jax.ShapeDtypeStruct((B_pad, n_pad), out_dtype)
    scratch = [pltpu.VMEM((TB, n_pad), jnp.float32)]

    # Per-method cost (weighted paths use K = Hb_pad, not Hb+Hk).
    cost = pl.CostEstimate(
        flops=int(2 * B_pad * K * H1_pad + 2 * B_pad * H1_pad * n_pad),
        transcendentals=int(B_pad * H1_pad),
        bytes_accessed=int(B_pad * (Hb_pad + Hk_pad) * a_bytes
                           + (K * H1_pad + H1_pad * n_pad) * a_bytes
                           + (H1_pad + n_pad) * 4
                           + B_pad * n_pad * o_bytes),
    )
    cparams = pltpu.CompilerParams(
        dimension_semantics=("parallel", "arbitrary"),
        vmem_limit_bytes=vmem_limit,
    )

    # ---- kernel selection ----------------------------------------------------
    if concat:
        kernel_fn = functools.partial(_head_kernel_concat, h_base=Hb_pad)
        args = (base, know, W1, b1, W2, b2)
    else:
        if combination_method == "average":
            wts = jnp.array([0.5, 0.5], dtype=jnp.float32)
        elif combination_method == "attention":
            wts = jax.nn.softmax(params["attention_w"].astype(jnp.float32), axis=0)
        elif combination_method == "gated":
            g = jax.nn.sigmoid(params["gate_weight"].astype(jnp.float32))[0]
            wts = jnp.stack([g, 1.0 - g])
        else:
            raise ValueError(f"Unknown combination method: {combination_method}")
        kernel_fn = _head_kernel_weighted
        args = (wts, base, know, W1, b1, W2, b2)

    # Try single-buffered resident weights first; fall back to default
    # double-buffering if pl.Buffered(1) is not supported by this toolchain.
    last_err = None
    for single_buffer_weights in (True, False):
        try:
            out = pl.pallas_call(
                kernel_fn,
                out_shape=out_shape,
                grid=grid,
                in_specs=build_in_specs(single_buffer_weights),
                out_specs=out_spec,
                scratch_shapes=scratch,
                compiler_params=cparams,
                cost_estimate=cost,
            )(*args)
            break
        except Exception as e:            # noqa: BLE001 - retry with default buffering
            last_err = e
    else:
        raise last_err

    return out[:B, :n_classes].astype(jnp.float32)


# ----------------------------------------------------------------------------
# Pure-JAX reference (for correctness check)
# ----------------------------------------------------------------------------
def reference_forward(base_output, knowledge_last_hidden_state, params, method):
    know = knowledge_last_hidden_state[:, 0, :]
    if method == "concat":
        combined = jnp.concatenate([base_output, know], axis=1)
    elif method == "average":
        combined = (base_output + know) / 2.0
    elif method == "attention":
        aw = jax.nn.softmax(params["attention_w"], axis=0)
        combined = aw[0] * base_output + aw[1] * know
    elif method == "gated":
        g = jax.nn.sigmoid(params["gate_weight"])[0]
        combined = g * base_output + (1.0 - g) * know
    h = jnp.tanh(combined @ params["W1"] + params["b1"])
    return h @ params["W2"] + params["b2"]


def _make_params(keys, h_base, h_know, n_classes, method):
    combined = h_base + h_know if method == "concat" else h_base
    kw1, kb1, kw2, kb2, katt, kgate = keys
    return {
        "W1": jax.random.normal(kw1, (combined, h_base), dtype=jnp.float32) * 0.1,
        "b1": jax.random.normal(kb1, (h_base,), dtype=jnp.float32) * 0.1,
        "W2": jax.random.normal(kw2, (h_base, n_classes), dtype=jnp.float32) * 0.1,
        "b2": jax.random.normal(kb2, (n_classes,), dtype=jnp.float32) * 0.1,
        "attention_w": jax.random.normal(katt, (2,), dtype=jnp.float32),
        "gate_weight": jax.random.normal(kgate, (1,), dtype=jnp.float32),
    }


# ----------------------------------------------------------------------------
# Main
# ----------------------------------------------------------------------------
if __name__ == "__main__":
    root = jax.random.PRNGKey(0)

    cases = [
        # (label, B, S, h_base, h_know, n_classes, method, kwargs, tol)
        ("f32-concat",     2, 8, 32, 32, 2, "concat",    {},                 1e-5),
        ("f32-average",    2, 8, 32, 32, 2, "average",   {},                 1e-5),
        ("f32-attention",  2, 8, 32, 32, 2, "attention", {},                 1e-5),
        ("f32-gated",      2, 8, 32, 32, 2, "gated",     {},                 1e-5),
        # bf16 compute path (f32 accumulation, bf16 output writeback)
        ("bf16-concat",    2, 8, 32, 32, 2, "concat",
         dict(compute_dtype=jnp.bfloat16),                                   5e-2),
        # bf16 with non-tile-aligned feature dims (exercises sublane padding)
        ("bf16-unaligned", 4, 8, 24, 40, 3, "concat",
         dict(compute_dtype=jnp.bfloat16),                                   5e-2),
        # multi-step batch grid + batch padding
        ("f32-batchgrid", 20, 8, 32, 32, 2, "concat",    dict(batch_tile=8), 1e-5),
        ("f32-gated-grid", 20, 8, 64, 64, 2, "gated",    {},                 1e-5),
        # H1-tiled weight streaming path (accumulator + pl.when init/finalize)
        ("f32-h1tiled",   36, 8, 256, 128, 2, "concat",
         dict(h1_tile=128, batch_tile=16),                                   2e-4),
    ]

    for idx, (label, B, S, hb, hk, nc, method, kw, tol) in enumerate(cases):
        k = jax.random.fold_in(root, idx)
        kb, kk, *pkeys = jax.random.split(k, 8)
        base = jax.random.normal(kb, (B, hb), dtype=jnp.float32)
        know = jax.random.normal(kk, (B, S, hk), dtype=jnp.float32)
        params = _make_params(pkeys, hb, hk, nc, method)

        out = combined_model_forward(base, know, params,
                                     combination_method=method, **kw)
        out = jax.block_until_ready(out)
        ref = reference_forward(base, know, params, method)
        assert out.shape == (B, nc), (label, out.shape)
        assert jnp.allclose(out, ref, atol=tol, rtol=tol), f"mismatch: {label}"

    print("KERNEL_OK")
</pallas_src>

<mosaic_0001>
module attributes {stable_mosaic.version = 11 : i64} {
  func.func @_head_kernel_concat(%arg0: i32, %arg1: i32, %arg2: memref<8x32xf32, #tpu.memory_space<vmem>>, %arg3: memref<8x32xf32, #tpu.memory_space<vmem>>, %arg4: memref<64x32xf32, #tpu.memory_space<vmem>>, %arg5: memref<1x32xf32, #tpu.memory_space<vmem>>, %arg6: memref<32x128xf32, #tpu.memory_space<vmem>>, %arg7: memref<1x128xf32, #tpu.memory_space<vmem>>, %arg8: memref<8x128xf32, #tpu.memory_space<vmem>>, %arg9: memref<8x128xf32, #tpu.memory_space<vmem>>) attributes {dimension_semantics = [#tpu.dimension_semantics<parallel>, #tpu.dimension_semantics<arbitrary>], iteration_bounds = array<i64: 1, 1>, scalar_prefetch = 0 : i64, scratch_operands = 1 : i64, tpu.core_type = #tpu.core_type<tc>, window_params = [{transform_indices = @transform_0, window_bounds = array<i64: 8, 32>}, {transform_indices = @transform_1, window_bounds = array<i64: 8, 32>}, {pipeline_mode = #tpu.pipeline_mode<synchronous>, transform_indices = @transform_2, window_bounds = array<i64: 64, 32>}, {pipeline_mode = #tpu.pipeline_mode<synchronous>, transform_indices = @transform_3, window_bounds = array<i64: 1, 32>}, {pipeline_mode = #tpu.pipeline_mode<synchronous>, transform_indices = @transform_4, window_bounds = array<i64: 32, 128>}, {pipeline_mode = #tpu.pipeline_mode<synchronous>, transform_indices = @transform_5, window_bounds = array<i64: 1, 128>}, {transform_indices = @transform_6, window_bounds = array<i64: 8, 128>}]} {
    %c0_i32 = arith.constant 0 : i32
    %0 = arith.cmpi eq, %arg1, %c0_i32 : i32
    %1 = arith.extui %0 : i1 to i32
    %c0_i32_0 = arith.constant 0 : i32
    %2 = arith.cmpi ne, %1, %c0_i32_0 : i32
    scf.if %2 {
      %cst_19 = arith.constant 0.000000e+00 : f32
      %22 = vector.broadcast %cst_19 : f32 to vector<8x128xf32>
      %c0_20 = arith.constant 0 : index
      %c0_21 = arith.constant 0 : index
      %23 = vector.load %arg9[%c0_20, %c0_21] : memref<8x128xf32, #tpu.memory_space<vmem>>, vector<8x128xf32>
      tpu.vector_store %arg9[%c0_20, %c0_21], %22 {strides = array<i32>} : memref<8x128xf32, #tpu.memory_space<vmem>>, vector<8x128xf32>,
    } else {
    }
    %c0 = arith.constant 0 : index
    %c0_1 = arith.constant 0 : index
    %3 = vector.load %arg2[%c0, %c0_1] : memref<8x32xf32, #tpu.memory_space<vmem>>, vector<8x32xf32>
    %c0_2 = arith.constant 0 : index
    %c0_3 = arith.constant 0 : index
    %4 = vector.load %arg4[%c0_2, %c0_3] : memref<64x32xf32, #tpu.memory_space<vmem>>, vector<32x32xf32>
    %cst = arith.constant dense<0.000000e+00> : vector<8x32xf32>
    %5 = tpu.matmul %3, %4, %cst {dimension_numbers = #tpu.dot_dimension_numbers<[1], [0], [0], [1], [0, 0, 1, 1], [], []>} : vector<8x32xf32>, vector<32x32xf32>, vector<8x32xf32> -> vector<8x32xf32>
    %c0_4 = arith.constant 0 : index
    %c0_5 = arith.constant 0 : index
    %6 = vector.load %arg3[%c0_4, %c0_5] : memref<8x32xf32, #tpu.memory_space<vmem>>, vector<8x32xf32>
    %c32 = arith.constant 32 : index
    %c0_6 = arith.constant 0 : index
    %7 = vector.load %arg4[%c32, %c0_6] : memref<64x32xf32, #tpu.memory_space<vmem>>, vector<32x32xf32>
    %cst_7 = arith.constant dense<0.000000e+00> : vector<8x32xf32>
    %8 = tpu.matmul %6, %7, %cst_7 {dimension_numbers = #tpu.dot_dimension_numbers<[1], [0], [0], [1], [0, 0, 1, 1], [], []>} : vector<8x32xf32>, vector<32x32xf32>, vector<8x32xf32> -> vector<8x32xf32>
    %9 = arith.addf %5, %8 : vector<8x32xf32>
    %c0_8 = arith.constant 0 : index
    %c0_9 = arith.constant 0 : index
    %10 = vector.load %arg5[%c0_8, %c0_9] : memref<1x32xf32, #tpu.memory_space<vmem>>, vector<1x32xf32>
    %11 = vector.broadcast %10 : vector<1x32xf32> to vector<8x32xf32>
    %12 = arith.addf %9, %11 : vector<8x32xf32>
    %13 = math.tanh %12 : vector<8x32xf32>
    %c0_10 = arith.constant 0 : index
    %c0_11 = arith.constant 0 : index
    %14 = vector.load %arg9[%c0_10, %c0_11] : memref<8x128xf32, #tpu.memory_space<vmem>>, vector<8x128xf32>
    %c0_12 = arith.constant 0 : index
    %c0_13 = arith.constant 0 : index
    %15 = vector.load %arg6[%c0_12, %c0_13] : memref<32x128xf32, #tpu.memory_space<vmem>>, vector<32x128xf32>
    %cst_14 = arith.constant dense<0.000000e+00> : vector<8x128xf32>
    %16 = tpu.matmul %13, %15, %cst_14 {dimension_numbers = #tpu.dot_dimension_numbers<[1], [0], [0], [1], [0, 0, 1, 1], [], []>} : vector<8x32xf32>, vector<32x128xf32>, vector<8x128xf32> -> vector<8x128xf32>
    %17 = arith.addf %14, %16 : vector<8x128xf32>
    %c0_15 = arith.constant 0 : index
    %c0_16 = arith.constant 0 : index
    %18 = vector.load %arg9[%c0_15, %c0_16] : memref<8x128xf32, #tpu.memory_space<vmem>>, vector<8x128xf32>
    tpu.vector_store %arg9[%c0_15, %c0_16], %17 {strides = array<i32>} : memref<8x128xf32, #tpu.memory_space<vmem>>, vector<8x128xf32>,
    %c0_i32_17 = arith.constant 0 : i32
    %19 = arith.cmpi eq, %arg1, %c0_i32_17 : i32
    %20 = arith.extui %19 : i1 to i32
    %c0_i32_18 = arith.constant 0 : i32
    %21 = arith.cmpi ne, %20, %c0_i32_18 : i32
    scf.if %21 {
      %c0_19 = arith.constant 0 : index
      %c0_20 = arith.constant 0 : index
      %22 = vector.load %arg9[%c0_19, %c0_20] : memref<8x128xf32, #tpu.memory_space<vmem>>, vector<8x128xf32>
      %c0_21 = arith.constant 0 : index
      %c0_22 = arith.constant 0 : index
      %23 = vector.load %arg7[%c0_21, %c0_22] : memref<1x128xf32, #tpu.memory_space<vmem>>, vector<1x128xf32>
      %24 = vector.broadcast %23 : vector<1x128xf32> to vector<8x128xf32>
      %25 = arith.addf %22, %24 : vector<8x128xf32>
      %c0_23 = arith.constant 0 : index
      %c0_24 = arith.constant 0 : index
      %26 = vector.load %arg8[%c0_23, %c0_24] : memref<8x128xf32, #tpu.memory_space<vmem>>, vector<8x128xf32>
      tpu.vector_store %arg8[%c0_23, %c0_24], %25 {strides = array<i32>} : memref<8x128xf32, #tpu.memory_space<vmem>>, vector<8x128xf32>,
    } else {
    }
    return
  }
  func.func @transform_0(%arg0: i32, %arg1: i32) -> (i32, i32) {
    %c0_i32 = arith.constant 0 : i32
    %c0_i32_0 = arith.constant 0 : i32
    return %arg0, %c0_i32 : i32, i32
  }
  func.func @transform_1(%arg0: i32, %arg1: i32) -> (i32, i32) {
    %c0_i32 = arith.constant 0 : i32
    %c0_i32_0 = arith.constant 0 : i32
    return %arg0, %c0_i32 : i32, i32
  }
  func.func @transform_2(%arg0: i32, %arg1: i32) -> (i32, i32) {
    %c0_i32 = arith.constant 0 : i32
    %c0_i32_0 = arith.constant 0 : i32
    return %c0_i32, %arg1 : i32, i32
  }
  func.func @transform_3(%arg0: i32, %arg1: i32) -> (i32, i32) {
    %c0_i32 = arith.constant 0 : i32
    %c0_i32_0 = arith.constant 0 : i32
    return %c0_i32, %arg1 : i32, i32
  }
  func.func @transform_4(%arg0: i32, %arg1: i32) -> (i32, i32) {
    %c0_i32 = arith.constant 0 : i32
    %c0_i32_0 = arith.constant 0 : i32
    return %arg1, %c0_i32 : i32, i32
  }
  func.func @transform_5(%arg0: i32, %arg1: i32) -> (i32, i32) {
    %c0_i32 = arith.constant 0 : i32
    %c0_i32_0 = arith.constant 0 : i32
    %c0_i32_1 = arith.constant 0 : i32
    return %c0_i32, %c0_i32_0 : i32, i32
  }
  func.func @transform_6(%arg0: i32, %arg1: i32) -> (i32, i32) {
    %c0_i32 = arith.constant 0 : i32
    %c0_i32_0 = arith.constant 0 : i32
    return %arg0, %c0_i32 : i32, i32
  }
}

module attributes {stable_mosaic.version = 11 : i64} {
  func.func @_head_kernel_concat(%arg0: i32, %arg1: i32, %arg2: memref<8x32xf32, #tpu.memory_space<vmem>>, %arg3: memref<8x32xf32, #tpu.memory_space<vmem>>, %arg4: memref<64x32xf32, #tpu.memory_space<vmem>>, %arg5: memref<1x32xf32, #tpu.memory_space<vmem>>, %arg6: memref<32x128xf32, #tpu.memory_space<vmem>>, %arg7: memref<1x128xf32, #tpu.memory_space<vmem>>, %arg8: memref<8x128xf32, #tpu.memory_space<vmem>>, %arg9: memref<8x128xf32, #tpu.memory_space<vmem>>) attributes {dimension_semantics = [#tpu.dimension_semantics<parallel>, #tpu.dimension_semantics<arbitrary>], iteration_bounds = array<i64: 1, 1>, scalar_prefetch = 0 : i64, scratch_operands = 1 : i64, tpu.core_type = #tpu.core_type<tc>, window_params = [{transform_indices = @transform_0, window_bounds = array<i64: 8, 32>}, {transform_indices = @transform_1, window_bounds = array<i64: 8, 32>}, {transform_indices = @transform_2, window_bounds = array<i64: 64, 32>}, {transform_indices = @transform_3, window_bounds = array<i64: 1, 32>}, {transform_indices = @transform_4, window_bounds = array<i64: 32, 128>}, {pipeline_mode = #tpu.pipeline_mode<synchronous>, transform_indices = @transform_5, window_bounds = array<i64: 1, 128>}, {transform_indices = @transform_6, window_bounds = array<i64: 8, 128>}]} {
    %c0_i32 = arith.constant 0 : i32
    %0 = arith.cmpi eq, %arg1, %c0_i32 : i32
    %1 = arith.extui %0 : i1 to i32
    %c0_i32_0 = arith.constant 0 : i32
    %2 = arith.cmpi ne, %1, %c0_i32_0 : i32
    scf.if %2 {
      %cst_19 = arith.constant 0.000000e+00 : f32
      %22 = vector.broadcast %cst_19 : f32 to vector<8x128xf32>
      %c0_20 = arith.constant 0 : index
      %c0_21 = arith.constant 0 : index
      %23 = vector.load %arg9[%c0_20, %c0_21] : memref<8x128xf32, #tpu.memory_space<vmem>>, vector<8x128xf32>
      tpu.vector_store %arg9[%c0_20, %c0_21], %22 {strides = array<i32>} : memref<8x128xf32, #tpu.memory_space<vmem>>, vector<8x128xf32>,
    } else {
    }
    %c0 = arith.constant 0 : index
    %c0_1 = arith.constant 0 : index
    %3 = vector.load %arg2[%c0, %c0_1] : memref<8x32xf32, #tpu.memory_space<vmem>>, vector<8x32xf32>
    %c0_2 = arith.constant 0 : index
    %c0_3 = arith.constant 0 : index
    %4 = vector.load %arg4[%c0_2, %c0_3] : memref<64x32xf32, #tpu.memory_space<vmem>>, vector<32x32xf32>
    %cst = arith.constant dense<0.000000e+00> : vector<8x32xf32>
    %5 = tpu.matmul %3, %4, %cst {dimension_numbers = #tpu.dot_dimension_numbers<[1], [0], [0], [1], [0, 0, 1, 1], [], []>} : vector<8x32xf32>, vector<32x32xf32>, vector<8x32xf32> -> vector<8x32xf32>
    %c0_4 = arith.constant 0 : index
    %c0_5 = arith.constant 0 : index
    %6 = vector.load %arg3[%c0_4, %c0_5] : memref<8x32xf32, #tpu.memory_space<vmem>>, vector<8x32xf32>
    %c32 = arith.constant 32 : index
    %c0_6 = arith.constant 0 : index
    %7 = vector.load %arg4[%c32, %c0_6] : memref<64x32xf32, #tpu.memory_space<vmem>>, vector<32x32xf32>
    %cst_7 = arith.constant dense<0.000000e+00> : vector<8x32xf32>
    %8 = tpu.matmul %6, %7, %cst_7 {dimension_numbers = #tpu.dot_dimension_numbers<[1], [0], [0], [1], [0, 0, 1, 1], [], []>} : vector<8x32xf32>, vector<32x32xf32>, vector<8x32xf32> -> vector<8x32xf32>
    %9 = arith.addf %5, %8 : vector<8x32xf32>
    %c0_8 = arith.constant 0 : index
    %c0_9 = arith.constant 0 : index
    %10 = vector.load %arg5[%c0_8, %c0_9] : memref<1x32xf32, #tpu.memory_space<vmem>>, vector<1x32xf32>
    %11 = vector.broadcast %10 : vector<1x32xf32> to vector<8x32xf32>
    %12 = arith.addf %9, %11 : vector<8x32xf32>
    %13 = math.tanh %12 : vector<8x32xf32>
    %c0_10 = arith.constant 0 : index
    %c0_11 = arith.constant 0 : index
    %14 = vector.load %arg9[%c0_10, %c0_11] : memref<8x128xf32, #tpu.memory_space<vmem>>, vector<8x128xf32>
    %c0_12 = arith.constant 0 : index
    %c0_13 = arith.constant 0 : index
    %15 = vector.load %arg6[%c0_12, %c0_13] : memref<32x128xf32, #tpu.memory_space<vmem>>, vector<32x128xf32>
    %cst_14 = arith.constant dense<0.000000e+00> : vector<8x128xf32>
    %16 = tpu.matmul %13, %15, %cst_14 {dimension_numbers = #tpu.dot_dimension_numbers<[1], [0], [0], [1], [0, 0, 1, 1], [], []>} : vector<8x32xf32>, vector<32x128xf32>, vector<8x128xf32> -> vector<8x128xf32>
    %17 = arith.addf %14, %16 : vector<8x128xf32>
    %c0_15 = arith.constant 0 : index
    %c0_16 = arith.constant 0 : index
    %18 = vector.load %arg9[%c0_15, %c0_16] : memref<8x128xf32, #tpu.memory_space<vmem>>, vector<8x128xf32>
    tpu.vector_store %arg9[%c0_15, %c0_16], %17 {strides = array<i32>} : memref<8x128xf32, #tpu.memory_space<vmem>>, vector<8x128xf32>,
    %c0_i32_17 = arith.constant 0 : i32
    %19 = arith.cmpi eq, %arg1, %c0_i32_17 : i32
    %20 = arith.extui %19 : i1 to i32
    %c0_i32_18 = arith.constant 0 : i32
    %21 = arith.cmpi ne, %20, %c0_i32_18 : i32
    scf.if %21 {
      %c0_19 = arith.constant 0 : index
      %c0_20 = arith.constant 0 : index
      %22 = vector.load %arg9[%c0_19, %c0_20] : memref<8x128xf32, #tpu.memory_space<vmem>>, vector<8x128xf32>
      %c0_21 = arith.constant 0 : index
      %c0_22 = arith.constant 0 : index
      %23 = vector.load %arg7[%c0_21, %c0_22] : memref<1x128xf32, #tpu.memory_space<vmem>>, vector<1x128xf32>
      %24 = vector.broadcast %23 : vector<1x128xf32> to vector<8x128xf32>
      %25 = arith.addf %22, %24 : vector<8x128xf32>
      %c0_23 = arith.constant 0 : index
      %c0_24 = arith.constant 0 : index
      %26 = vector.load %arg8[%c0_23, %c0_24] : memref<8x128xf32, #tpu.memory_space<vmem>>, vector<8x128xf32>
      tpu.vector_store %arg8[%c0_23, %c0_24], %25 {strides = array<i32>} : memref<8x128xf32, #tpu.memory_space<vmem>>, vector<8x128xf32>,
    } else {
    }
    return
  }
  func.func @transform_0(%arg0: i32, %arg1: i32) -> (i32, i32) {
    %c0_i32 = arith.constant 0 : i32
    %c0_i32_0 = arith.constant 0 : i32
    return %arg0, %c0_i32 : i32, i32
  }
  func.func @transform_1(%arg0: i32, %arg1: i32) -> (i32, i32) {
    %c0_i32 = arith.constant 0 : i32
    %c0_i32_0 = arith.constant 0 : i32
    return %arg0, %c0_i32 : i32, i32
  }
  func.func @transform_2(%arg0: i32, %arg1: i32) -> (i32, i32) {
    %c0_i32 = arith.constant 0 : i32
    %c0_i32_0 = arith.constant 0 : i32
    return %c0_i32, %arg1 : i32, i32
  }
  func.func @transform_3(%arg0: i32, %arg1: i32) -> (i32, i32) {
    %c0_i32 = arith.constant 0 : i32
    %c0_i32_0 = arith.constant 0 : i32
    return %c0_i32, %arg1 : i32, i32
  }
  func.func @transform_4(%arg0: i32, %arg1: i32) -> (i32, i32) {
    %c0_i32 = arith.constant 0 : i32
    %c0_i32_0 = arith.constant 0 : i32
    return %arg1, %c0_i32 : i32, i32
  }
  func.func @transform_5(%arg0: i32, %arg1: i32) -> (i32, i32) {
    %c0_i32 = arith.constant 0 : i32
    %c0_i32_0 = arith.constant 0 : i32
    %c0_i32_1 = arith.constant 0 : i32
    return %c0_i32, %c0_i32_0 : i32, i32
  }
  func.func @transform_6(%arg0: i32, %arg1: i32) -> (i32, i32) {
    %c0_i32 = arith.constant 0 : i32
    %c0_i32_0 = arith.constant 0 : i32
    return %arg0, %c0_i32 : i32, i32
  }
}

</mosaic_0001>

<llo_original>
// kernel: tpu_custom_call.1
$region0: #{tpu_custom_call.1}
  #allocation0 [shape = 'u32[]', space=smem, size = 0x4, offset = 0x4, fixed_abs, tag = 'smem constant byte address 0x4 - core index']
  #allocation1 [shape = 'u32[144,128]{1,0:T(1,128)}', space=vmem, size = 0x12000, scoped, tag = 'internal scratch']
  #allocation2 [shape = 'f32[8,128]{1,0:T(8,128)}', space=vmem, size = 0x1000, scoped, tag = 'scratch operand']
  %s0 = inlined_call_operand.vmem [shape: f32[8,32], index: 0, kind: input, shape index: {}]
  %s1 = inlined_call_operand.vmem [shape: f32[8,32], index: 1, kind: input, shape index: {}]
  %s2 = inlined_call_operand.vmem [shape: f32[64,32], index: 2, kind: input, shape index: {}]
  %s3 = inlined_call_operand.vmem [shape: f32[1,32], index: 3, kind: input, shape index: {}]
  %s4 = inlined_call_operand.vmem [shape: f32[32,128], index: 4, kind: input, shape index: {}]
  %s5 = inlined_call_operand.vmem [shape: f32[1,128], index: 5, kind: input, shape index: {}]
  %s6 = inlined_call_operand.hbm [shape: f32[8,128], index: 6, kind: output, shape index: {}]
  %s7 = sld [smem:[#allocation0]]
  $region42: #{tpu_custom_call.1} parent=0
    _
  %s9 = ssub.s32 1, %s7
  %s10 = scalar_select 0, %s9, %s7
  $region1: #{tpu_custom_call.1} parent=0
    #allocation3 [shape = 'u8[4096]{0}', space=vmem, size = 0x1000, scoped, tag = 'output window, operand 0, single buffered']
    #allocation4 [shape = 's32[1]{0}', space=sflag, size = 0x4, scoped, tag = 'scoped memory for tpu_custom_call.1']
    %11 = vsyncpa [#allocation4], 0
    // Predicated region
    $region2: #{tpu_custom_call.1} parent=1 // pred_check
      _
    $region3: #{tpu_custom_call.1} parent=1 // pred_check_branch
      %13 = sbr.rel (0) target = $region5
    $region4: #{tpu_custom_call.1} parent=1 // pred_region
      _
    $region5: #{tpu_custom_call.1} parent=1 // pred_fallthru
      _
    // Predicated region
    $region6: #{tpu_custom_call.1} parent=1 // pred_check
      _
    $region7: #{tpu_custom_call.1} parent=1 // pred_check_branch
      %15 = sbr.rel (0) target = $region9
    $region8: #{tpu_custom_call.1} parent=1 // pred_region
      _
    $region9: #{tpu_custom_call.1} parent=1 // pred_fallthru
      _
    // Predicated region
    $region10: #{tpu_custom_call.1} parent=1 // pred_check
      _
    $region11: #{tpu_custom_call.1} parent=1 // pred_check_branch
      %17 = sbr.rel (0) target = $region13
    $region12: #{tpu_custom_call.1} parent=1 // pred_region
      _
    $region13: #{tpu_custom_call.1} parent=1 // pred_fallthru
      _
    // Predicated region
    $region14: #{tpu_custom_call.1} parent=1 // pred_check
      _
    $region15: #{tpu_custom_call.1} parent=1 // pred_check_branch
      %19 = sbr.rel (0) target = $region17
    $region16: #{tpu_custom_call.1} parent=1 // pred_region
      _
    $region17: #{tpu_custom_call.1} parent=1 // pred_fallthru
      _
    // Predicated region
    $region18: #{tpu_custom_call.1} parent=1 // pred_check
      _
    $region19: #{tpu_custom_call.1} parent=1 // pred_check_branch
      %21 = sbr.rel (0) target = $region21
    $region20: #{tpu_custom_call.1} parent=1 // pred_region
      _
    $region21: #{tpu_custom_call.1} parent=1 // pred_fallthru
      _
    // Predicated region
    $region22: #{tpu_custom_call.1} parent=1 // pred_check
      _
    $region23: #{tpu_custom_call.1} parent=1 // pred_check_branch
      %23 = sbr.rel (0) target = $region25
    $region24: #{tpu_custom_call.1} parent=1 // pred_region
      _
    $region25: #{tpu_custom_call.1} parent=1 // pred_fallthru
      _
    %p24 = scmp.eq.s32.totalorder 0, 0
    // Predicated region
    $region26: #{tpu_custom_call.1} parent=1 // pred_check
      %p25 = pneg %p24
    $region27: #{tpu_custom_call.1} parent=1 // pred_check_branch
      %27 = sbr.rel (%p25) target = $region29
    $region28: #{tpu_custom_call.1} parent=1 // pred_region
      %28 = vst [vmem:[#allocation2] sm:$0xff] 0.0
    $region29: #{tpu_custom_call.1} parent=1 // pred_fallthru
      _
    %v29 = vld [vmem:[%s0] sm:$0xff]
    %v30 = vld [vmem:[%s2] sm:$0xff]
    %v31 = vld [vmem:[%s2 + $0x8] sm:$0xff]
    %v32 = vld [vmem:[%s2 + $0x10] sm:$0xff]
    %v33 = vld [vmem:[%s2 + $0x18] sm:$0xff]
    %v34 = vld [vmem:[%s1] sm:$0xff]
    %v35 = vld [vmem:[%s2 + $0x20] sm:$0xff]
    %v36 = vld [vmem:[%s2 + $0x28] sm:$0xff]
    %v37 = vld [vmem:[%s2 + $0x30] sm:$0xff]
    %v38 = vld [vmem:[%s2 + $0x38] sm:$0xff]
    %vm39 = vcmask 261120
    %v41 = vsel %vm39, %v34, 0
    %43 = vmatprep.subr.mxu0 0.0
    %44 = vmatpush1.msra.mxu0 0.0
    %45 = vmatprep.subr.mxu0 0.0
    %46 = vmatpush1.msra.mxu0 0.0
    %47 = vmatprep.subr.mxu0 0.0
    %48 = vmatpush1.msra.mxu0 0.0
    %49 = vmatprep.subr.mxu0 0.0
    %50 = vmatpush1.msra.mxu0 0.0
    %51 = vmatprep.subr.mxu0 0.0
    %52 = vmatpush1.msra.mxu0 0.0
    %53 = vmatprep.subr.mxu0 0.0
    %54 = vmatpush1.msra.mxu0 0.0
    %55 = vmatprep.subr.mxu0 0.0
    %56 = vmatpush1.msra.mxu0 0.0
    %57 = vmatprep.subr.mxu0 0.0
    %58 = vmatpush1.msra.mxu0 0.0
    %59 = vmatprep.subr.mxu0 0.0
    %60 = vmatpush1.msra.mxu0 0.0
    %61 = vmatprep.subr.mxu0 0.0
    %62 = vmatpush1.msra.mxu0 0.0
    %63 = vmatprep.subr.mxu0 0.0
    %64 = vmatpush1.msra.mxu0 0.0
    %65 = vmatprep.subr.mxu0 0.0
    %66 = vmatpush1.msra.mxu0 0.0
    %67 = vmatprep.subr.mxu0 0.0
    %68 = vmatpush1.msra.mxu0 %v38
    %69 = vmatprep.subr.mxu0 0.0
    %70 = vmatpush1.msra.mxu0 %v37
    %71 = vmatprep.subr.mxu0 0.0
    %72 = vmatpush1.msra.mxu0 %v36
    %73 = vmatprep.subr.mxu0 0.0
    %74 = vmatpush1.msra.mxu0 %v35
    %75 = vmatprep.subr.mxu0 0.0
    %76 = vmatpush2.msra.mxu0 0.0
    %77 = vmatprep.subr.mxu0 0.0
    %78 = vmatpush2.msra.mxu0 0.0
    %79 = vmatprep.subr.mxu0 0.0
    %80 = vmatpush2.msra.mxu0 0.0
    %81 = vmatprep.subr.mxu0 0.0
    %82 = vmatpush2.msra.mxu0 0.0
    %83 = vmatprep.subr.mxu0 0.0
    %84 = vmatpush2.msra.mxu0 0.0
    %85 = vmatprep.subr.mxu0 0.0
    %86 = vmatpush2.msra.mxu0 0.0
    %87 = vmatprep.subr.mxu0 0.0
    %88 = vmatpush2.msra.mxu0 0.0
    %89 = vmatprep.subr.mxu0 0.0
    %90 = vmatpush2.msra.mxu0 0.0
    %91 = vmatprep.subr.mxu0 0.0
    %92 = vmatpush2.msra.mxu0 0.0
    %93 = vmatprep.subr.mxu0 0.0
    %94 = vmatpush2.msra.mxu0 0.0
    %95 = vmatprep.subr.mxu0 0.0
    %96 = vmatpush2.msra.mxu0 0.0
    %97 = vmatprep.subr.mxu0 0.0
    %98 = vmatpush2.msra.mxu0 0.0
    %99 = vmatprep.subr.mxu0 0.0
    %100 = vmatpush2.msra.mxu0 0.0
    %101 = vmatprep.subr.mxu0 0.0
    %102 = vmatpush2.msra.mxu0 0.0
    %103 = vmatprep.subr.mxu0 0.0
    %104 = vmatpush2.msra.mxu0 0.0
    %105 = vmatprep.subr.mxu0 0.0
    %106 = vmatpush2.msra.mxu0 0.0
    %107 = vmatprep.mubr.f32.mxu0 0.0
    %108 = vmatmul.mubr.f32.gmra.mxu0 %v41
    %v109 = vpop.f32.mrf.mxu0
    %v110 = vadd.f32 0.0, %v109
    %v111 = vpop.f32.mrf.mxu0
    %112 = vdwg.mxu0
    %v114 = vsel %vm39, %v29, 0
    %116 = vmatprep.subr.mxu0 0.0
    %117 = vmatpush1.msra.mxu0 0.0
    %118 = vmatprep.subr.mxu0 0.0
    %119 = vmatpush1.msra.mxu0 0.0
    %120 = vmatprep.subr.mxu0 0.0
    %121 = vmatpush1.msra.mxu0 0.0
    %122 = vmatprep.subr.mxu0 0.0
    %123 = vmatpush1.msra.mxu0 0.0
    %124 = vmatprep.subr.mxu0 0.0
    %125 = vmatpush1.msra.mxu0 0.0
    %126 = vmatprep.subr.mxu0 0.0
    %127 = vmatpush1.msra.mxu0 0.0
    %128 = vmatprep.subr.mxu0 0.0
    %129 = vmatpush1.msra.mxu0 0.0
    %130 = vmatprep.subr.mxu0 0.0
    %131 = vmatpush1.msra.mxu0 0.0
    %132 = vmatprep.subr.mxu0 0.0
    %133 = vmatpush1.msra.mxu0 0.0
    %134 = vmatprep.subr.mxu0 0.0
    %135 = vmatpush1.msra.mxu0 0.0
    %136 = vmatprep.subr.mxu0 0.0
    %137 = vmatpush1.msra.mxu0 0.0
    %138 = vmatprep.subr.mxu0 0.0
    %139 = vmatpush1.msra.mxu0 0.0
    %140 = vmatprep.subr.mxu0 0.0
    %141 = vmatpush1.msra.mxu0 %v33
    %142 = vmatprep.subr.mxu0 0.0
    %143 = vmatpush1.msra.mxu0 %v32
    %144 = vmatprep.subr.mxu0 0.0
    %145 = vmatpush1.msra.mxu0 %v31
    %146 = vmatprep.subr.mxu0 0.0
    %147 = vmatpush1.msra.mxu0 %v30
    %148 = vmatprep.subr.mxu0 0.0
    %149 = vmatpush2.msra.mxu0 0.0
    %150 = vmatprep.subr.mxu0 0.0
    %151 = vmatpush2.msra.mxu0 0.0
    %152 = vmatprep.subr.mxu0 0.0
    %153 = vmatpush2.msra.mxu0 0.0
    %154 = vmatprep.subr.mxu0 0.0
    %155 = vmatpush2.msra.mxu0 0.0
    %156 = vmatprep.subr.mxu0 0.0
    %157 = vmatpush2.msra.mxu0 0.0
    %158 = vmatprep.subr.mxu0 0.0
    %159 = vmatpush2.msra.mxu0 0.0
    %160 = vmatprep.subr.mxu0 0.0
    %161 = vmatpush2.msra.mxu0 0.0
    %162 = vmatprep.subr.mxu0 0.0
    %163 = vmatpush2.msra.mxu0 0.0
    %164 = vmatprep.subr.mxu0 0.0
    %165 = vmatpush2.msra.mxu0 0.0
    %166 = vmatprep.subr.mxu0 0.0
    %167 = vmatpush2.msra.mxu0 0.0
    %168 = vmatprep.subr.mxu0 0.0
    %169 = vmatpush2.msra.mxu0 0.0
    %170 = vmatprep.subr.mxu0 0.0
    %171 = vmatpush2.msra.mxu0 0.0
    %172 = vmatprep.subr.mxu0 0.0
    %173 = vmatpush2.msra.mxu0 0.0
    %174 = vmatprep.subr.mxu0 0.0
    %175 = vmatpush2.msra.mxu0 0.0
    %176 = vmatprep.subr.mxu0 0.0
    %177 = vmatpush2.msra.mxu0 0.0
    %178 = vmatprep.subr.mxu0 0.0
    %179 = vmatpush2.msra.mxu0 0.0
    %180 = vmatprep.mubr.f32.mxu0 0.0
    %181 = vmatmul.mubr.f32.gmra.mxu0 %v114
    %v182 = vpop.f32.mrf.mxu0
    %v183 = vadd.f32 %v110, %v182
    %v184 = vpop.f32.mrf.mxu0
    %185 = vdwg.mxu0
    %v186 = vld [vmem:[%s3] sm:$0x1]
    %v188 = vlaneseq
    %v189 = vshrl.u32 %v188, 7
    %v190 = vsub.s32 0, %v189
    %v191 = vrot.slane %v186, %v190
    %v193 = vadd.f32 %v183, %v191
    %v194 = vtanh.pop %v193
    %v195 = vld [vmem:[#allocation2] sm:$0xff]
    %v196 = vld [vmem:[%s4] sm:$0xff]
    %v197 = vld [vmem:[%s4 + $0x8] sm:$0xff]
    %v198 = vld [vmem:[%s4 + $0x10] sm:$0xff]
    %v199 = vld [vmem:[%s4 + $0x18] sm:$0xff]
    %v201 = vsel %vm39, %v194, 0
    %203 = vmatprep.subr.mxu0 0.0
    %204 = vmatpush1.msra.mxu0 0.0
    %205 = vmatprep.subr.mxu0 0.0
    %206 = vmatpush1.msra.mxu0 0.0
    %207 = vmatprep.subr.mxu0 0.0
    %208 = vmatpush1.msra.mxu0 0.0
    %209 = vmatprep.subr.mxu0 0.0
    %210 = vmatpush1.msra.mxu0 0.0
    %211 = vmatprep.subr.mxu0 0.0
    %212 = vmatpush1.msra.mxu0 0.0
    %213 = vmatprep.subr.mxu0 0.0
    %214 = vmatpush1.msra.mxu0 0.0
    %215 = vmatprep.subr.mxu0 0.0
    %216 = vmatpush1.msra.mxu0 0.0
    %217 = vmatprep.subr.mxu0 0.0
    %218 = vmatpush1.msra.mxu0 0.0
    %219 = vmatprep.subr.mxu0 0.0
    %220 = vmatpush1.msra.mxu0 0.0
    %221 = vmatprep.subr.mxu0 0.0
    %222 = vmatpush1.msra.mxu0 0.0
    %223 = vmatprep.subr.mxu0 0.0
    %224 = vmatpush1.msra.mxu0 0.0
    %225 = vmatprep.subr.mxu0 0.0
    %226 = vmatpush1.msra.mxu0 0.0
    %227 = vmatprep.subr.mxu0 0.0
    %228 = vmatpush1.msra.mxu0 %v199
    %229 = vmatprep.subr.mxu0 0.0
    %230 = vmatpush1.msra.mxu0 %v198
    %231 = vmatprep.subr.mxu0 0.0
    %232 = vmatpush1.msra.mxu0 %v197
    %233 = vmatprep.subr.mxu0 0.0
    %234 = vmatpush1.msra.mxu0 %v196
    %235 = vmatprep.subr.mxu0 0.0
    %236 = vmatpush2.msra.mxu0 0.0
    %237 = vmatprep.subr.mxu0 0.0
    %238 = vmatpush2.msra.mxu0 0.0
    %239 = vmatprep.subr.mxu0 0.0
    %240 = vmatpush2.msra.mxu0 0.0
    %241 = vmatprep.subr.mxu0 0.0
    %242 = vmatpush2.msra.mxu0 0.0
    %243 = vmatprep.subr.mxu0 0.0
    %244 = vmatpush2.msra.mxu0 0.0
    %245 = vmatprep.subr.mxu0 0.0
    %246 = vmatpush2.msra.mxu0 0.0
    %247 = vmatprep.subr.mxu0 0.0
    %248 = vmatpush2.msra.mxu0 0.0
    %249 = vmatprep.subr.mxu0 0.0
    %250 = vmatpush2.msra.mxu0 0.0
    %251 = vmatprep.subr.mxu0 0.0
    %252 = vmatpush2.msra.mxu0 0.0
    %253 = vmatprep.subr.mxu0 0.0
    %254 = vmatpush2.msra.mxu0 0.0
    %255 = vmatprep.subr.mxu0 0.0
    %256 = vmatpush2.msra.mxu0 0.0
    %257 = vmatprep.subr.mxu0 0.0
    %258 = vmatpush2.msra.mxu0 0.0
    %259 = vmatprep.subr.mxu0 0.0
    %260 = vmatpush2.msra.mxu0 0.0
    %261 = vmatprep.subr.mxu0 0.0
    %262 = vmatpush2.msra.mxu0 0.0
    %263 = vmatprep.subr.mxu0 0.0
    %264 = vmatpush2.msra.mxu0 0.0
    %265 = vmatprep.subr.mxu0 0.0
    %266 = vmatpush2.msra.mxu0 0.0
    %267 = vmatprep.mubr.f32.mxu0 0.0
    %268 = vmatmul.mubr.f32.gmra.mxu0 %v201
    %v269 = vpop.f32.mrf.mxu0
    %v270 = vadd.f32 0.0, %v269
    %v271 = vpop.f32.mrf.mxu0
    %272 = vdwg.mxu0
    %v273 = vadd.f32 %v195, %v270
    %274 = vst [vmem:[#allocation2] sm:$0xff] %v273
    // Predicated region
    $region30: #{tpu_custom_call.1} parent=1 // pred_check
      %p275 = pneg %p24
    $region31: #{tpu_custom_call.1} parent=1 // pred_check_branch
      %277 = sbr.rel (%p275) target = $region33
    $region32: #{tpu_custom_call.1} parent=1 // pred_region
      %v278 = vld [vmem:[#allocation2] sm:$0xff]
      %v279 = vld [vmem:[%s5] sm:$0x1]
      %v281 = vlaneseq
      %v282 = vshrl.u32 %v281, 7
      %v283 = vsub.s32 0, %v282
      %v284 = vrot.slane %v279, %v283
      %v286 = vadd.f32 %v278, %v284
      %287 = vst [vmem:[#allocation3] sm:$0xff] %v286
    $region33: #{tpu_custom_call.1} parent=1 // pred_fallthru
      _
    // Predicated region
    $region34: #{tpu_custom_call.1} parent=1 // pred_check
      _
    $region35: #{tpu_custom_call.1} parent=1 // pred_check_branch
      %289 = sbr.rel (0) target = $region37
    $region36: #{tpu_custom_call.1} parent=1 // pred_region
      %s291 = ssub.s32 128, 128
      %292 = vsyncadd [#allocation4], %s291
      %s294 = sshll.u32 [#allocation3], 4
      %s295 = int_to_ptr.vmem [resolvable:$true] %s294
      %297 = dma.vmem_to_hbm [thread:$0]  %s295, 128, %s6, [#allocation4]
    $region37: #{tpu_custom_call.1} parent=1 // pred_fallthru
      _
    // Predicated region
    $region38: #{tpu_custom_call.1} parent=1 // pred_check
      _
    $region39: #{tpu_custom_call.1} parent=1 // pred_check_branch
      %299 = sbr.rel (0) target = $region41
    $region40: #{tpu_custom_call.1} parent=1 // pred_region
      %300 = dma.done [#allocation4], 128
    $region41: #{tpu_custom_call.1} parent=1 // pred_fallthru
      _
    %301 = vsyncpa [#allocation4], 1

// kernel: tpu_custom_call.1
$region0: #{tpu_custom_call.1}
  #allocation0 [shape = 'u32[]', space=smem, size = 0x4, offset = 0x4, fixed_abs, tag = 'smem constant byte address 0x4 - core index']
  #allocation1 [shape = 'u32[144,128]{1,0:T(1,128)}', space=vmem, size = 0x12000, scoped, tag = 'internal scratch']
  #allocation2 [shape = 'f32[8,128]{1,0:T(8,128)}', space=vmem, size = 0x1000, scoped, tag = 'scratch operand']
  %s0 = inlined_call_operand.vmem [shape: f32[8,32], index: 0, kind: input, shape index: {}]
  %s1 = inlined_call_operand.vmem [shape: f32[8,32], index: 1, kind: input, shape index: {}]
  %s2 = inlined_call_operand.vmem [shape: f32[64,32], index: 2, kind: input, shape index: {}]
  %s3 = inlined_call_operand.vmem [shape: f32[1,32], index: 3, kind: input, shape index: {}]
  %s4 = inlined_call_operand.vmem [shape: f32[32,128], index: 4, kind: input, shape index: {}]
  %s5 = inlined_call_operand.vmem [shape: f32[1,128], index: 5, kind: input, shape index: {}]
  %s6 = inlined_call_operand.hbm [shape: f32[8,128], index: 6, kind: output, shape index: {}]
  %s7 = sld [smem:[#allocation0]]
  $region42: #{tpu_custom_call.1} parent=0
    _
  %s9 = ssub.s32 1, %s7
  %s10 = scalar_select 0, %s9, %s7
  $region1: #{tpu_custom_call.1} parent=0
    #allocation3 [shape = 'u8[4096]{0}', space=vmem, size = 0x1000, scoped, tag = 'output window, operand 0, single buffered']
    #allocation4 [shape = 's32[1]{0}', space=sflag, size = 0x4, scoped, tag = 'scoped memory for tpu_custom_call.1']
    %11 = vsyncpa [#allocation4], 0
    // Predicated region
    $region2: #{tpu_custom_call.1} parent=1 // pred_check
      _
    $region3: #{tpu_custom_call.1} parent=1 // pred_check_branch
      %13 = sbr.rel (0) target = $region5
    $region4: #{tpu_custom_call.1} parent=1 // pred_region
      _
    $region5: #{tpu_custom_call.1} parent=1 // pred_fallthru
      _
    // Predicated region
    $region6: #{tpu_custom_call.1} parent=1 // pred_check
      _
    $region7: #{tpu_custom_call.1} parent=1 // pred_check_branch
      %15 = sbr.rel (0) target = $region9
    $region8: #{tpu_custom_call.1} parent=1 // pred_region
      _
    $region9: #{tpu_custom_call.1} parent=1 // pred_fallthru
      _
    // Predicated region
    $region10: #{tpu_custom_call.1} parent=1 // pred_check
      _
    $region11: #{tpu_custom_call.1} parent=1 // pred_check_branch
      %17 = sbr.rel (0) target = $region13
    $region12: #{tpu_custom_call.1} parent=1 // pred_region
      _
    $region13: #{tpu_custom_call.1} parent=1 // pred_fallthru
      _
    // Predicated region
    $region14: #{tpu_custom_call.1} parent=1 // pred_check
      _
    $region15: #{tpu_custom_call.1} parent=1 // pred_check_branch
      %19 = sbr.rel (0) target = $region17
    $region16: #{tpu_custom_call.1} parent=1 // pred_region
      _
    $region17: #{tpu_custom_call.1} parent=1 // pred_fallthru
      _
    // Predicated region
    $region18: #{tpu_custom_call.1} parent=1 // pred_check
      _
    $region19: #{tpu_custom_call.1} parent=1 // pred_check_branch
      %21 = sbr.rel (0) target = $region21
    $region20: #{tpu_custom_call.1} parent=1 // pred_region
      _
    $region21: #{tpu_custom_call.1} parent=1 // pred_fallthru
      _
    // Predicated region
    $region22: #{tpu_custom_call.1} parent=1 // pred_check
      _
    $region23: #{tpu_custom_call.1} parent=1 // pred_check_branch
      %23 = sbr.rel (0) target = $region25
    $region24: #{tpu_custom_call.1} parent=1 // pred_region
      _
    $region25: #{tpu_custom_call.1} parent=1 // pred_fallthru
      _
    %p24 = scmp.eq.s32.totalorder 0, 0
    // Predicated region
    $region26: #{tpu_custom_call.1} parent=1 // pred_check
      %p25 = pneg %p24
    $region27: #{tpu_custom_call.1} parent=1 // pred_check_branch
      %27 = sbr.rel (%p25) target = $region29
    $region28: #{tpu_custom_call.1} parent=1 // pred_region
      %28 = vst [vmem:[#allocation2] sm:$0xff] 0.0
    $region29: #{tpu_custom_call.1} parent=1 // pred_fallthru
      _
    %v29 = vld [vmem:[%s0] sm:$0xff]
    %v30 = vld [vmem:[%s2] sm:$0xff]
    %v31 = vld [vmem:[%s2 + $0x8] sm:$0xff]
    %v32 = vld [vmem:[%s2 + $0x10] sm:$0xff]
    %v33 = vld [vmem:[%s2 + $0x18] sm:$0xff]
    %v34 = vld [vmem:[%s1] sm:$0xff]
    %v35 = vld [vmem:[%s2 + $0x20] sm:$0xff]
    %v36 = vld [vmem:[%s2 + $0x28] sm:$0xff]
    %v37 = vld [vmem:[%s2 + $0x30] sm:$0xff]
    %v38 = vld [vmem:[%s2 + $0x38] sm:$0xff]
    %vm39 = vcmask 261120
    %v41 = vsel %vm39, %v34, 0
    %43 = vmatprep.subr.mxu0 0.0
    %44 = vmatpush1.msra.mxu0 0.0
    %45 = vmatprep.subr.mxu0 0.0
    %46 = vmatpush1.msra.mxu0 0.0
    %47 = vmatprep.subr.mxu0 0.0
    %48 = vmatpush1.msra.mxu0 0.0
    %49 = vmatprep.subr.mxu0 0.0
    %50 = vmatpush1.msra.mxu0 0.0
    %51 = vmatprep.subr.mxu0 0.0
    %52 = vmatpush1.msra.mxu0 0.0
    %53 = vmatprep.subr.mxu0 0.0
    %54 = vmatpush1.msra.mxu0 0.0
    %55 = vmatprep.subr.mxu0 0.0
    %56 = vmatpush1.msra.mxu0 0.0
    %57 = vmatprep.subr.mxu0 0.0
    %58 = vmatpush1.msra.mxu0 0.0
    %59 = vmatprep.subr.mxu0 0.0
    %60 = vmatpush1.msra.mxu0 0.0
    %61 = vmatprep.subr.mxu0 0.0
    %62 = vmatpush1.msra.mxu0 0.0
    %63 = vmatprep.subr.mxu0 0.0
    %64 = vmatpush1.msra.mxu0 0.0
    %65 = vmatprep.subr.mxu0 0.0
    %66 = vmatpush1.msra.mxu0 0.0
    %67 = vmatprep.subr.mxu0 0.0
    %68 = vmatpush1.msra.mxu0 %v38
    %69 = vmatprep.subr.mxu0 0.0
    %70 = vmatpush1.msra.mxu0 %v37
    %71 = vmatprep.subr.mxu0 0.0
    %72 = vmatpush1.msra.mxu0 %v36
    %73 = vmatprep.subr.mxu0 0.0
    %74 = vmatpush1.msra.mxu0 %v35
    %75 = vmatprep.subr.mxu0 0.0
    %76 = vmatpush2.msra.mxu0 0.0
    %77 = vmatprep.subr.mxu0 0.0
    %78 = vmatpush2.msra.mxu0 0.0
    %79 = vmatprep.subr.mxu0 0.0
    %80 = vmatpush2.msra.mxu0 0.0
    %81 = vmatprep.subr.mxu0 0.0
    %82 = vmatpush2.msra.mxu0 0.0
    %83 = vmatprep.subr.mxu0 0.0
    %84 = vmatpush2.msra.mxu0 0.0
    %85 = vmatprep.subr.mxu0 0.0
    %86 = vmatpush2.msra.mxu0 0.0
    %87 = vmatprep.subr.mxu0 0.0
    %88 = vmatpush2.msra.mxu0 0.0
    %89 = vmatprep.subr.mxu0 0.0
    %90 = vmatpush2.msra.mxu0 0.0
    %91 = vmatprep.subr.mxu0 0.0
    %92 = vmatpush2.msra.mxu0 0.0
    %93 = vmatprep.subr.mxu0 0.0
    %94 = vmatpush2.msra.mxu0 0.0
    %95 = vmatprep.subr.mxu0 0.0
    %96 = vmatpush2.msra.mxu0 0.0
    %97 = vmatprep.subr.mxu0 0.0
    %98 = vmatpush2.msra.mxu0 0.0
    %99 = vmatprep.subr.mxu0 0.0
    %100 = vmatpush2.msra.mxu0 0.0
    %101 = vmatprep.subr.mxu0 0.0
    %102 = vmatpush2.msra.mxu0 0.0
    %103 = vmatprep.subr.mxu0 0.0
    %104 = vmatpush2.msra.mxu0 0.0
    %105 = vmatprep.subr.mxu0 0.0
    %106 = vmatpush2.msra.mxu0 0.0
    %107 = vmatprep.mubr.f32.mxu0 0.0
    %108 = vmatmul.mubr.f32.gmra.mxu0 %v41
    %v109 = vpop.f32.mrf.mxu0
    %v110 = vadd.f32 0.0, %v109
    %v111 = vpop.f32.mrf.mxu0
    %112 = vdwg.mxu0
    %v114 = vsel %vm39, %v29, 0
    %116 = vmatprep.subr.mxu0 0.0
    %117 = vmatpush1.msra.mxu0 0.0
    %118 = vmatprep.subr.mxu0 0.0
    %119 = vmatpush1.msra.mxu0 0.0
    %120 = vmatprep.subr.mxu0 0.0
    %121 = vmatpush1.msra.mxu0 0.0
    %122 = vmatprep.subr.mxu0 0.0
    %123 = vmatpush1.msra.mxu0 0.0
    %124 = vmatprep.subr.mxu0 0.0
    %125 = vmatpush1.msra.mxu0 0.0
    %126 = vmatprep.subr.mxu0 0.0
    %127 = vmatpush1.msra.mxu0 0.0
    %128 = vmatprep.subr.mxu0 0.0
    %129 = vmatpush1.msra.mxu0 0.0
    %130 = vmatprep.subr.mxu0 0.0
    %131 = vmatpush1.msra.mxu0 0.0
    %132 = vmatprep.subr.mxu0 0.0
    %133 = vmatpush1.msra.mxu0 0.0
    %134 = vmatprep.subr.mxu0 0.0
    %135 = vmatpush1.msra.mxu0 0.0
    %136 = vmatprep.subr.mxu0 0.0
    %137 = vmatpush1.msra.mxu0 0.0
    %138 = vmatprep.subr.mxu0 0.0
    %139 = vmatpush1.msra.mxu0 0.0
    %140 = vmatprep.subr.mxu0 0.0
    %141 = vmatpush1.msra.mxu0 %v33
    %142 = vmatprep.subr.mxu0 0.0
    %143 = vmatpush1.msra.mxu0 %v32
    %144 = vmatprep.subr.mxu0 0.0
    %145 = vmatpush1.msra.mxu0 %v31
    %146 = vmatprep.subr.mxu0 0.0
    %147 = vmatpush1.msra.mxu0 %v30
    %148 = vmatprep.subr.mxu0 0.0
    %149 = vmatpush2.msra.mxu0 0.0
    %150 = vmatprep.subr.mxu0 0.0
    %151 = vmatpush2.msra.mxu0 0.0
    %152 = vmatprep.subr.mxu0 0.0
    %153 = vmatpush2.msra.mxu0 0.0
    %154 = vmatprep.subr.mxu0 0.0
    %155 = vmatpush2.msra.mxu0 0.0
    %156 = vmatprep.subr.mxu0 0.0
    %157 = vmatpush2.msra.mxu0 0.0
    %158 = vmatprep.subr.mxu0 0.0
    %159 = vmatpush2.msra.mxu0 0.0
    %160 = vmatprep.subr.mxu0 0.0
    %161 = vmatpush2.msra.mxu0 0.0
    %162 = vmatprep.subr.mxu0 0.0
    %163 = vmatpush2.msra.mxu0 0.0
    %164 = vmatprep.subr.mxu0 0.0
    %165 = vmatpush2.msra.mxu0 0.0
    %166 = vmatprep.subr.mxu0 0.0
    %167 = vmatpush2.msra.mxu0 0.0
    %168 = vmatprep.subr.mxu0 0.0
    %169 = vmatpush2.msra.mxu0 0.0
    %170 = vmatprep.subr.mxu0 0.0
    %171 = vmatpush2.msra.mxu0 0.0
    %172 = vmatprep.subr.mxu0 0.0
    %173 = vmatpush2.msra.mxu0 0.0
    %174 = vmatprep.subr.mxu0 0.0
    %175 = vmatpush2.msra.mxu0 0.0
    %176 = vmatprep.subr.mxu0 0.0
    %177 = vmatpush2.msra.mxu0 0.0
    %178 = vmatprep.subr.mxu0 0.0
    %179 = vmatpush2.msra.mxu0 0.0
    %180 = vmatprep.mubr.f32.mxu0 0.0
    %181 = vmatmul.mubr.f32.gmra.mxu0 %v114
    %v182 = vpop.f32.mrf.mxu0
    %v183 = vadd.f32 %v110, %v182
    %v184 = vpop.f32.mrf.mxu0
    %185 = vdwg.mxu0
    %v186 = vld [vmem:[%s3] sm:$0x1]
    %v188 = vlaneseq
    %v189 = vshrl.u32 %v188, 7
    %v190 = vsub.s32 0, %v189
    %v191 = vrot.slane %v186, %v190
    %v193 = vadd.f32 %v183, %v191
    %v194 = vtanh.pop %v193
    %v195 = vld [vmem:[#allocation2] sm:$0xff]
    %v196 = vld [vmem:[%s4] sm:$0xff]
    %v197 = vld [vmem:[%s4 + $0x8] sm:$0xff]
    %v198 = vld [vmem:[%s4 + $0x10] sm:$0xff]
    %v199 = vld [vmem:[%s4 + $0x18] sm:$0xff]
    %v201 = vsel %vm39, %v194, 0
    %203 = vmatprep.subr.mxu0 0.0
    %204 = vmatpush1.msra.mxu0 0.0
    %205 = vmatprep.subr.mxu0 0.0
    %206 = vmatpush1.msra.mxu0 0.0
    %207 = vmatprep.subr.mxu0 0.0
    %208 = vmatpush1.msra.mxu0 0.0
    %209 = vmatprep.subr.mxu0 0.0
    %210 = vmatpush1.msra.mxu0 0.0
    %211 = vmatprep.subr.mxu0 0.0
    %212 = vmatpush1.msra.mxu0 0.0
    %213 = vmatprep.subr.mxu0 0.0
    %214 = vmatpush1.msra.mxu0 0.0
    %215 = vmatprep.subr.mxu0 0.0
    %216 = vmatpush1.msra.mxu0 0.0
    %217 = vmatprep.subr.mxu0 0.0
    %218 = vmatpush1.msra.mxu0 0.0
    %219 = vmatprep.subr.mxu0 0.0
    %220 = vmatpush1.msra.mxu0 0.0
    %221 = vmatprep.subr.mxu0 0.0
    %222 = vmatpush1.msra.mxu0 0.0
    %223 = vmatprep.subr.mxu0 0.0
    %224 = vmatpush1.msra.mxu0 0.0
    %225 = vmatprep.subr.mxu0 0.0
    %226 = vmatpush1.msra.mxu0 0.0
    %227 = vmatprep.subr.mxu0 0.0
    %228 = vmatpush1.msra.mxu0 %v199
    %229 = vmatprep.subr.mxu0 0.0
    %230 = vmatpush1.msra.mxu0 %v198
    %231 = vmatprep.subr.mxu0 0.0
    %232 = vmatpush1.msra.mxu0 %v197
    %233 = vmatprep.subr.mxu0 0.0
    %234 = vmatpush1.msra.mxu0 %v196
    %235 = vmatprep.subr.mxu0 0.0
    %236 = vmatpush2.msra.mxu0 0.0
    %237 = vmatprep.subr.mxu0 0.0
    %238 = vmatpush2.msra.mxu0 0.0
    %239 = vmatprep.subr.mxu0 0.0
    %240 = vmatpush2.msra.mxu0 0.0
    %241 = vmatprep.subr.mxu0 0.0
    %242 = vmatpush2.msra.mxu0 0.0
    %243 = vmatprep.subr.mxu0 0.0
    %244 = vmatpush2.msra.mxu0 0.0
    %245 = vmatprep.subr.mxu0 0.0
    %246 = vmatpush2.msra.mxu0 0.0
    %247 = vmatprep.subr.mxu0 0.0
    %248 = vmatpush2.msra.mxu0 0.0
    %249 = vmatprep.subr.mxu0 0.0
    %250 = vmatpush2.msra.mxu0 0.0
    %251 = vmatprep.subr.mxu0 0.0
    %252 = vmatpush2.msra.mxu0 0.0
    %253 = vmatprep.subr.mxu0 0.0
    %254 = vmatpush2.msra.mxu0 0.0
    %255 = vmatprep.subr.mxu0 0.0
    %256 = vmatpush2.msra.mxu0 0.0
    %257 = vmatprep.subr.mxu0 0.0
    %258 = vmatpush2.msra.mxu0 0.0
    %259 = vmatprep.subr.mxu0 0.0
    %260 = vmatpush2.msra.mxu0 0.0
    %261 = vmatprep.subr.mxu0 0.0
    %262 = vmatpush2.msra.mxu0 0.0
    %263 = vmatprep.subr.mxu0 0.0
    %264 = vmatpush2.msra.mxu0 0.0
    %265 = vmatprep.subr.mxu0 0.0
    %266 = vmatpush2.msra.mxu0 0.0
    %267 = vmatprep.mubr.f32.mxu0 0.0
    %268 = vmatmul.mubr.f32.gmra.mxu0 %v201
    %v269 = vpop.f32.mrf.mxu0
    %v270 = vadd.f32 0.0, %v269
    %v271 = vpop.f32.mrf.mxu0
    %272 = vdwg.mxu0
    %v273 = vadd.f32 %v195, %v270
    %274 = vst [vmem:[#allocation2] sm:$0xff] %v273
    // Predicated region
    $region30: #{tpu_custom_call.1} parent=1 // pred_check
      %p275 = pneg %p24
    $region31: #{tpu_custom_call.1} parent=1 // pred_check_branch
      %277 = sbr.rel (%p275) target = $region33
    $region32: #{tpu_custom_call.1} parent=1 // pred_region
      %v278 = vld [vmem:[#allocation2] sm:$0xff]
      %v279 = vld [vmem:[%s5] sm:$0x1]
      %v281 = vlaneseq
      %v282 = vshrl.u32 %v281, 7
      %v283 = vsub.s32 0, %v282
      %v284 = vrot.slane %v279, %v283
      %v286 = vadd.f32 %v278, %v284
      %287 = vst [vmem:[#allocation3] sm:$0xff] %v286
    $region33: #{tpu_custom_call.1} parent=1 // pred_fallthru
      _
    // Predicated region
    $region34: #{tpu_custom_call.1} parent=1 // pred_check
      _
    $region35: #{tpu_custom_call.1} parent=1 // pred_check_branch
      %289 = sbr.rel (0) target = $region37
    $region36: #{tpu_custom_call.1} parent=1 // pred_region
      %s291 = ssub.s32 128, 128
      %292 = vsyncadd [#allocation4], %s291
      %s294 = sshll.u32 [#allocation3], 4
      %s295 = int_to_ptr.vmem [resolvable:$true] %s294
      %297 = dma.vmem_to_hbm [thread:$0]  %s295, 128, %s6, [#allocation4]
    $region37: #{tpu_custom_call.1} parent=1 // pred_fallthru
      _
    // Predicated region
    $region38: #{tpu_custom_call.1} parent=1 // pred_check
      _
    $region39: #{tpu_custom_call.1} parent=1 // pred_check_branch
      %299 = sbr.rel (0) target = $region41
    $region40: #{tpu_custom_call.1} parent=1 // pred_region
      %300 = dma.done [#allocation4], 128
    $region41: #{tpu_custom_call.1} parent=1 // pred_fallthru
      _
    %301 = vsyncpa [#allocation4], 1

</llo_original>
